<compile_context>
chip_gen: v6e
topology: v6e:2x2x1
jax: 0.10.0
libtpu: 0.0.40
codegen_flags: <defaults>
</compile_context>

<pallas_src>
import jax
import jax.numpy as jnp
from jax.experimental import pallas as pl
from jax.experimental.pallas import tpu as pltpu


def _leaky_relu(x, slope=0.2):
    return jnp.where(x > 0, x, slope * x)


def _softplus(x):
    # numerically-stable softplus = log(1 + exp(x))
    return jnp.maximum(x, 0.0) + jnp.log1p(jnp.exp(-jnp.abs(x)))


def mine_kernel(x1_ref, x2_ref, w1_ref, w2_ref, small_ref, out_ref):
    B = x1_ref.shape[0]

    # ---- build the stacked (2B, D1+D2) LHS entirely in vregs -----------------
    # pos rows: [x1, x2] ; neg rows: [x1, roll(x2, 1, 0)]  (torch.roll shifts=1)
    x1 = x1_ref[...]                                   # (B, D1)
    x2 = x2_ref[...]                                   # (B, D2)
    x2r = pltpu.roll(x2, 1, 0)                         # XLU sublane rotate (free slot)
    lhs = jnp.concatenate(
        [jnp.concatenate([x1, x2], axis=-1),
         jnp.concatenate([x1, x2r], axis=-1)], axis=0)  # (2B, D1+D2)

    # ---- unpack the pre-packed small-param slab -------------------------------
    b1 = small_ref[0:1, :]                             # (1, H1)
    b2 = small_ref[1:2, :]                             # (1, H2)
    w3 = small_ref[2:3, :]                             # (1, H2) final Linear as a row
    b3 = small_ref[3:4, 0:1]                           # (1, 1)

    # ---- layer 1: single MXU pass over the full K = D1+D2 --------------------
    h = jnp.dot(lhs, w1_ref[...], preferred_element_type=jnp.float32) + b1
    h = _leaky_relu(h)                                  # (2B, H1)

    # ---- layer 2 --------------------------------------------------------------
    h = jnp.dot(h, w2_ref[...], preferred_element_type=jnp.float32) + b2
    h = _leaky_relu(h)                                  # (2B, H2)

    # ---- layer 3 (H2 -> 1) as VPU multiply + cross-lane reduce ----------------
    scores = jnp.sum(h * w3, axis=-1, keepdims=True) + b3   # (2B, 1)
    pos = scores[:B]
    neg = scores[B:]

    # ---- reductions ------------------------------------------------------------
    inv_b = 1.0 / B
    pos_mean = jnp.sum(pos) * inv_b
    m = jnp.max(neg)                                     # overflow-safe log-mean-exp
    neg_lme = m + jnp.log(jnp.sum(jnp.exp(neg - m)) * inv_b)

    # single softplus pass: flip sign on the pos rows, then one reduce
    row = jax.lax.broadcasted_iota(jnp.int32, scores.shape, 0)
    signed = jnp.where(row < B, -scores, scores)
    loss = jnp.sum(_softplus(signed)) * inv_b

    out_ref[0] = pos_mean - neg_lme
    out_ref[1] = loss


def prep_params(params):
    """One-time (outside the hot path) param packing for the kernel."""
    w1, b1, w2, b2, w3, b3 = params
    h1 = w2.shape[0]
    h2 = w2.shape[1]
    assert h1 == h2, "small-param slab packing assumes H1 == H2"
    small = jnp.concatenate(
        [b1.reshape(1, h1).astype(jnp.float32),
         b2.reshape(1, h2).astype(jnp.float32),
         w3.reshape(1, h2).astype(jnp.float32),          # (H2, 1) column -> (1, H2) row
         jnp.pad(b3.reshape(1, 1).astype(jnp.float32), ((0, 0), (0, h2 - 1)))],
        axis=0)                                           # (4, H)
    return (w1.astype(jnp.float32), w2.astype(jnp.float32), small)


@jax.jit
def mine_forward(x1, x2, prepped):
    """Returns (mi_lb, loss), each a float32 scalar."""
    w1, w2, small = prepped
    x1 = x1.astype(jnp.float32)
    x2 = x2.astype(jnp.float32)

    B, D1 = x1.shape
    D2 = x2.shape[1]
    H1 = w1.shape[1]
    H2 = w2.shape[1]
    flops = 2 * (2 * B) * (D1 + D2) * H1 + 2 * (2 * B) * H1 * H2 + 2 * (2 * B) * H2
    bytes_accessed = 4 * (x1.size + x2.size + w1.size + w2.size + small.size) + 8

    vmem = pl.BlockSpec(memory_space=pltpu.MemorySpace.VMEM)
    out = pl.pallas_call(
        mine_kernel,
        out_shape=jax.ShapeDtypeStruct((2,), jnp.float32),
        in_specs=[vmem] * 5,
        out_specs=pl.BlockSpec(memory_space=pltpu.MemorySpace.SMEM),
        cost_estimate=pl.CostEstimate(
            flops=flops,
            transcendentals=5 * 2 * B,
            bytes_accessed=bytes_accessed,
        ),
    )(x1, x2, w1, w2, small)
    return out[0], out[1]


def init_params(key, input_dim, hidden_dims=(128, 128)):
    """Deterministic synthetic parameters for the MLP: Linear/act/Linear/act/Linear(1)."""
    keys = jax.random.split(key, 6)
    h1, h2 = hidden_dims
    w1 = jax.random.normal(keys[0], (input_dim, h1), jnp.float32) * 0.05
    b1 = jax.random.normal(keys[1], (1, h1), jnp.float32) * 0.01
    w2 = jax.random.normal(keys[2], (h1, h2), jnp.float32) * 0.05
    b2 = jax.random.normal(keys[3], (1, h2), jnp.float32) * 0.01
    w3 = jax.random.normal(keys[4], (h2, 1), jnp.float32) * 0.05
    b3 = jax.random.normal(keys[5], (1, 1), jnp.float32) * 0.01
    return (w1, b1, w2, b2, w3, b3)


def ref_forward(x1, x2, params):
    """Pure-JAX reference (same math as the PyTorch module)."""
    w1, b1, w2, b2, w3, b3 = params

    def mlp(x):
        h = x @ w1 + b1
        h = jnp.where(h > 0, h, 0.2 * h)
        h = h @ w2 + b2
        h = jnp.where(h > 0, h, 0.2 * h)
        return h @ w3 + b3

    pos = mlp(jnp.concatenate([x1, x2], axis=-1))
    neg = mlp(jnp.concatenate([x1, jnp.roll(x2, 1, axis=0)], axis=-1))
    mi = pos.mean() - jnp.log(jnp.mean(jnp.exp(neg)))
    loss = jax.nn.softplus(-pos).mean() + jax.nn.softplus(neg).mean()
    return mi, loss


if __name__ == "__main__":
    key = jax.random.PRNGKey(0)
    k1, k2, kp = jax.random.split(key, 3)

    B, D1, D2 = 8, 64, 64            # input_dim = D1 + D2 = 128
    H1, H2 = 128, 128
    x1 = jax.random.normal(k1, (B, D1), jnp.float32)
    x2 = jax.random.normal(k2, (B, D2), jnp.float32)

    params = init_params(kp, D1 + D2, hidden_dims=(H1, H2))
    prepped = prep_params(params)    # one-time packing, outside the hot path

    mi_lb, loss = mine_forward(x1, x2, prepped)
    jax.block_until_ready((mi_lb, loss))

    mi_expected, loss_expected = ref_forward(x1, x2, params)
    assert jnp.allclose(mi_lb, mi_expected, atol=5e-4), (mi_lb, mi_expected)
    assert jnp.allclose(loss, loss_expected, atol=5e-4), (loss, loss_expected)

    print("KERNEL_OK")
</pallas_src>

<mosaic_0001>
module attributes {stable_mosaic.version = 11 : i64} {
  func.func @mine_kernel(%arg0: memref<8x64xf32, #tpu.memory_space<vmem>>, %arg1: memref<8x64xf32, #tpu.memory_space<vmem>>, %arg2: memref<128x128xf32, #tpu.memory_space<vmem>>, %arg3: memref<128x128xf32, #tpu.memory_space<vmem>>, %arg4: memref<4x128xf32, #tpu.memory_space<vmem>>, %arg5: memref<2xf32, #tpu.memory_space<smem>>) attributes {dimension_semantics = [], scalar_prefetch = 0 : i64, scratch_operands = 0 : i64, tpu.core_type = #tpu.core_type<tc>} {
    %c0 = arith.constant 0 : index
    %c0_0 = arith.constant 0 : index
    %0 = vector.load %arg0[%c0, %c0_0] : memref<8x64xf32, #tpu.memory_space<vmem>>, vector<8x64xf32>
    %c0_1 = arith.constant 0 : index
    %c0_2 = arith.constant 0 : index
    %1 = vector.load %arg1[%c0_1, %c0_2] : memref<8x64xf32, #tpu.memory_space<vmem>>, vector<8x64xf32>
    %c1_i32 = arith.constant 1 : i32
    %2 = tpu.dynamic_rotate %1 by %c1_i32 dim 0 : vector<8x64xf32>, i32 -> vector<8x64xf32>
    %3 = tpu.concatenate %0, %1 in 1 : vector<8x64xf32>, vector<8x64xf32> -> vector<8x128xf32>
    %4 = tpu.concatenate %0, %2 in 1 : vector<8x64xf32>, vector<8x64xf32> -> vector<8x128xf32>
    %5 = tpu.concatenate %3, %4 in 0 : vector<8x128xf32>, vector<8x128xf32> -> vector<16x128xf32>
    %c0_3 = arith.constant 0 : index
    %c0_4 = arith.constant 0 : index
    %6 = vector.load %arg4[%c0_3, %c0_4] : memref<4x128xf32, #tpu.memory_space<vmem>>, vector<1x128xf32>
    %c1 = arith.constant 1 : index
    %c0_5 = arith.constant 0 : index
    %7 = vector.load %arg4[%c1, %c0_5] : memref<4x128xf32, #tpu.memory_space<vmem>>, vector<1x128xf32>
    %c2 = arith.constant 2 : index
    %c0_6 = arith.constant 0 : index
    %8 = vector.load %arg4[%c2, %c0_6] : memref<4x128xf32, #tpu.memory_space<vmem>>, vector<1x128xf32>
    %c3 = arith.constant 3 : index
    %c0_7 = arith.constant 0 : index
    %9 = vector.load %arg4[%c3, %c0_7] : memref<4x128xf32, #tpu.memory_space<vmem>>, vector<1x1xf32>
    %c0_8 = arith.constant 0 : index
    %c0_9 = arith.constant 0 : index
    %10 = vector.load %arg2[%c0_8, %c0_9] : memref<128x128xf32, #tpu.memory_space<vmem>>, vector<128x128xf32>
    %cst = arith.constant dense<0.000000e+00> : vector<16x128xf32>
    %11 = tpu.matmul %5, %10, %cst {dimension_numbers = #tpu.dot_dimension_numbers<[1], [0], [0], [1], [0, 0, 1, 1], [], []>} : vector<16x128xf32>, vector<128x128xf32>, vector<16x128xf32> -> vector<16x128xf32>
    %12 = vector.broadcast %6 : vector<1x128xf32> to vector<16x128xf32>
    %13 = arith.addf %11, %12 : vector<16x128xf32>
    %cst_10 = arith.constant 0.000000e+00 : f32
    %14 = vector.broadcast %cst_10 : f32 to vector<16x128xf32>
    %15 = arith.cmpf ogt, %13, %14 : vector<16x128xf32>
    %cst_11 = arith.constant 2.000000e-01 : f32
    %16 = vector.broadcast %cst_11 : f32 to vector<16x128xf32>
    %17 = arith.mulf %16, %13 : vector<16x128xf32>
    %18 = arith.select %15, %13, %17 : vector<16x128xi1>, vector<16x128xf32>
    %c0_12 = arith.constant 0 : index
    %c0_13 = arith.constant 0 : index
    %19 = vector.load %arg3[%c0_12, %c0_13] : memref<128x128xf32, #tpu.memory_space<vmem>>, vector<128x128xf32>
    %cst_14 = arith.constant dense<0.000000e+00> : vector<16x128xf32>
    %20 = tpu.matmul %18, %19, %cst_14 {dimension_numbers = #tpu.dot_dimension_numbers<[1], [0], [0], [1], [0, 0, 1, 1], [], []>} : vector<16x128xf32>, vector<128x128xf32>, vector<16x128xf32> -> vector<16x128xf32>
    %21 = vector.broadcast %7 : vector<1x128xf32> to vector<16x128xf32>
    %22 = arith.addf %20, %21 : vector<16x128xf32>
    %cst_15 = arith.constant 0.000000e+00 : f32
    %23 = vector.broadcast %cst_15 : f32 to vector<16x128xf32>
    %24 = arith.cmpf ogt, %22, %23 : vector<16x128xf32>
    %cst_16 = arith.constant 2.000000e-01 : f32
    %25 = vector.broadcast %cst_16 : f32 to vector<16x128xf32>
    %26 = arith.mulf %25, %22 : vector<16x128xf32>
    %27 = arith.select %24, %22, %26 : vector<16x128xi1>, vector<16x128xf32>
    %28 = vector.broadcast %8 : vector<1x128xf32> to vector<16x128xf32>
    %29 = arith.mulf %27, %28 : vector<16x128xf32>
    %cst_17 = arith.constant dense<0.000000e+00> : vector<16xf32>
    %30 = vector.multi_reduction <add>, %29, %cst_17 [1] : vector<16x128xf32> to vector<16xf32>
    %31 = vector.shape_cast %30 : vector<16xf32> to vector<16x1xf32>
    %32 = vector.broadcast %9 : vector<1x1xf32> to vector<16x1xf32>
    %33 = arith.addf %31, %32 : vector<16x1xf32>
    %34 = vector.extract_strided_slice %33 {offsets = [0, 0], sizes = [8, 1], strides = [1, 1]} : vector<16x1xf32> to vector<8x1xf32>
    %35 = vector.extract_strided_slice %33 {offsets = [8, 0], sizes = [8, 1], strides = [1, 1]} : vector<16x1xf32> to vector<8x1xf32>
    %36 = vector.shape_cast %34 : vector<8x1xf32> to vector<1x8x1xf32>
    %cst_18 = arith.constant dense<0.000000e+00> : vector<1xf32>
    %37 = vector.multi_reduction <add>, %36, %cst_18 [1, 2] : vector<1x8x1xf32> to vector<1xf32>
    %38 = vector.shape_cast %37 : vector<1xf32> to vector<1x1x1xf32>
    %39 = vector.extract %38[0, 0, 0] : f32 from vector<1x1x1xf32>
    %cst_19 = arith.constant 1.250000e-01 : f32
    %40 = arith.mulf %39, %cst_19 : f32
    %41 = vector.shape_cast %35 : vector<8x1xf32> to vector<1x8x1xf32>
    %cst_20 = arith.constant dense<0xFF800000> : vector<1xf32>
    %42 = vector.multi_reduction <maximumf>, %41, %cst_20 [1, 2] : vector<1x8x1xf32> to vector<1xf32>
    %43 = vector.shape_cast %42 : vector<1xf32> to vector<1x1x1xf32>
    %44 = vector.extract %43[0, 0, 0] : f32 from vector<1x1x1xf32>
    %45 = vector.broadcast %44 : f32 to vector<8x1xf32>
    %46 = arith.subf %35, %45 : vector<8x1xf32>
    %47 = math.exp %46 : vector<8x1xf32>
    %48 = vector.shape_cast %47 : vector<8x1xf32> to vector<1x8x1xf32>
    %cst_21 = arith.constant dense<0.000000e+00> : vector<1xf32>
    %49 = vector.multi_reduction <add>, %48, %cst_21 [1, 2] : vector<1x8x1xf32> to vector<1xf32>
    %50 = vector.shape_cast %49 : vector<1xf32> to vector<1x1x1xf32>
    %51 = vector.extract %50[0, 0, 0] : f32 from vector<1x1x1xf32>
    %cst_22 = arith.constant 1.250000e-01 : f32
    %52 = arith.mulf %51, %cst_22 : f32
    %53 = math.log %52 : f32
    %54 = arith.addf %44, %53 : f32
    %55 = tpu.iota {dimensions = array<i32: 0>} : vector<16x1xi32>
    %c8_i32 = arith.constant 8 : i32
    %56 = vector.broadcast %c8_i32 : i32 to vector<16x1xi32>
    %57 = arith.cmpi slt, %55, %56 : vector<16x1xi32>
    %cst_23 = arith.constant 0.000000e+00 : f32
    %58 = vector.broadcast %cst_23 : f32 to vector<16x1xf32>
    %59 = arith.subf %58, %33 : vector<16x1xf32>
    %60 = arith.select %57, %59, %33 : vector<16x1xi1>, vector<16x1xf32>
    %cst_24 = arith.constant 0.000000e+00 : f32
    %61 = vector.broadcast %cst_24 : f32 to vector<16x1xf32>
    %62 = arith.maximumf %60, %61 : vector<16x1xf32>
    %63 = math.absf %60 : vector<16x1xf32>
    %cst_25 = arith.constant 0.000000e+00 : f32
    %64 = vector.broadcast %cst_25 : f32 to vector<16x1xf32>
    %65 = arith.subf %64, %63 : vector<16x1xf32>
    %66 = math.exp %65 : vector<16x1xf32>
    %67 = math.log1p %66 : vector<16x1xf32>
    %68 = arith.addf %62, %67 : vector<16x1xf32>
    %69 = vector.shape_cast %68 : vector<16x1xf32> to vector<1x16x1xf32>
    %cst_26 = arith.constant dense<0.000000e+00> : vector<1xf32>
    %70 = vector.multi_reduction <add>, %69, %cst_26 [1, 2] : vector<1x16x1xf32> to vector<1xf32>
    %71 = vector.shape_cast %70 : vector<1xf32> to vector<1x1x1xf32>
    %72 = vector.extract %71[0, 0, 0] : f32 from vector<1x1x1xf32>
    %cst_27 = arith.constant 1.250000e-01 : f32
    %73 = arith.mulf %72, %cst_27 : f32
    %74 = arith.subf %40, %54 : f32
    %c0_28 = arith.constant 0 : index
    %75 = memref.load %arg5[%c0_28] : memref<2xf32, #tpu.memory_space<smem>>
    memref.store %74, %arg5[%c0_28] : memref<2xf32, #tpu.memory_space<smem>>
    %c1_29 = arith.constant 1 : index
    %76 = memref.load %arg5[%c1_29] : memref<2xf32, #tpu.memory_space<smem>>
    memref.store %73, %arg5[%c1_29] : memref<2xf32, #tpu.memory_space<smem>>
    return
  }
}

</mosaic_0001>

<llo_original>
// kernel: mine_forward.1
$region0: #{mine_forward.1}
  #allocation0 [shape = 'u32[]', space=smem, size = 0x4, offset = 0x4, fixed_abs, tag = 'smem constant byte address 0x4 - core index']
  #allocation1 [shape = 'u32[144,128]{1,0:T(1,128)}', space=vmem, size = 0x12000, scoped, tag = 'internal scratch']
  %s0 = inlined_call_operand.hbm [shape: f32[8,64], index: 0, kind: input, shape index: {}]
  %s1 = inlined_call_operand.hbm [shape: f32[8,64], index: 1, kind: input, shape index: {}]
  %s2 = inlined_call_operand.hbm [shape: f32[128,128], index: 2, kind: input, shape index: {}]
  %s3 = inlined_call_operand.hbm [shape: f32[128,128], index: 3, kind: input, shape index: {}]
  %s4 = inlined_call_operand.vmem [shape: f32[4,128], index: 4, kind: input, shape index: {}]
  %s5 = inlined_call_operand.vmem [shape: f32[2], index: 5, kind: output, shape index: {}]
  %s6 = sld [smem:[#allocation0]]
  $region46: #{mine_forward.1} parent=0
    _
  %s8 = ssub.s32 1, %s6
  %s9 = scalar_select 0, %s8, %s6
  $region1: #{mine_forward.1} parent=0
    #allocation2 [shape = 'u8[4096]{0}', space=vmem, size = 0x1000, scoped, tag = 'input window, operand 0, single buffered']
    #allocation3 [shape = 's32[1]{0}', space=sflag, size = 0x4, scoped, tag = 'scoped memory for mine_forward.1']
    #allocation4 [shape = 's32[1]{0}', space=sflag, size = 0x4, scoped, tag = 'scoped memory for mine_forward.1']
    #allocation5 [shape = 'u8[4096]{0}', space=vmem, size = 0x1000, scoped, tag = 'input window, operand 1, single buffered']
    #allocation6 [shape = 's32[1]{0}', space=sflag, size = 0x4, scoped, tag = 'scoped memory for mine_forward.1']
    #allocation7 [shape = 'u8[65536]{0}', space=vmem, size = 0x10000, scoped, tag = 'input window, operand 2, single buffered']
    #allocation8 [shape = 'u8[65536]{0}', space=vmem, size = 0x10000, scoped, tag = 'input window, operand 3, single buffered']
    #allocation9 [shape = 's32[1]{0}', space=sflag, size = 0x4, scoped, tag = 'scoped memory for mine_forward.1']
    #allocation10 [shape = 'u8[512]{0}', space=smem, size = 0x200, scoped, tag = 'output window, operand 0, single buffered']
    %10 = vsyncpa [#allocation3], 0
    %11 = vsyncpa [#allocation6], 0
    %12 = vsyncpa [#allocation9], 0
    %13 = vsyncpa [#allocation4], 0
    // Predicated region
    $region2: #{mine_forward.1} parent=1 // pred_check
      _
    $region3: #{mine_forward.1} parent=1 // pred_check_branch
      %15 = sbr.rel (0) target = $region5
    $region4: #{mine_forward.1} parent=1 // pred_region
      %s17 = ssub.s32 128, 128
      %18 = vsyncadd [#allocation3], %s17
      %s20 = sshll.u32 [#allocation2], 4
      %s21 = int_to_ptr.vmem [resolvable:$true] %s20
      %23 = dma.hbm_to_vmem [thread:$0]  %s0, 128, %s21, [#allocation3]
    $region5: #{mine_forward.1} parent=1 // pred_fallthru
      _
    // Predicated region
    $region6: #{mine_forward.1} parent=1 // pred_check
      _
    $region7: #{mine_forward.1} parent=1 // pred_check_branch
      %25 = sbr.rel (0) target = $region9
    $region8: #{mine_forward.1} parent=1 // pred_region
      %s27 = ssub.s32 128, 128
      %28 = vsyncadd [#allocation6], %s27
      %s30 = sshll.u32 [#allocation5], 4
      %s31 = int_to_ptr.vmem [resolvable:$true] %s30
      %33 = dma.hbm_to_vmem [thread:$0]  %s1, 128, %s31, [#allocation6]
    $region9: #{mine_forward.1} parent=1 // pred_fallthru
      _
    // Predicated region
    $region10: #{mine_forward.1} parent=1 // pred_check
      _
    $region11: #{mine_forward.1} parent=1 // pred_check_branch
      %35 = sbr.rel (0) target = $region13
    $region12: #{mine_forward.1} parent=1 // pred_region
      %s37 = ssub.s32 2048, 2048
      %38 = vsyncadd [#allocation6], %s37
      %s39 = sshll.u32 [#allocation7], 4
      %s40 = int_to_ptr.vmem [resolvable:$true] %s39
      %45 = dma.hbm_to_vmem [thread:$0]  %s2, 2048, %s40, [#allocation6], 128, 128, 8
    $region13: #{mine_forward.1} parent=1 // pred_fallthru
      _
    // Predicated region
    $region14: #{mine_forward.1} parent=1 // pred_check
      _
    $region15: #{mine_forward.1} parent=1 // pred_check_branch
      %47 = sbr.rel (0) target = $region17
    $region16: #{mine_forward.1} parent=1 // pred_region
      %s49 = ssub.s32 2048, 2048
      %50 = vsyncadd [#allocation9], %s49
      %s51 = sshll.u32 [#allocation8], 4
      %s52 = int_to_ptr.vmem [resolvable:$true] %s51
      %57 = dma.hbm_to_vmem [thread:$0]  %s3, 2048, %s52, [#allocation9], 128, 128, 8
    $region17: #{mine_forward.1} parent=1 // pred_fallthru
      _
    // Predicated region
    $region18: #{mine_forward.1} parent=1 // pred_check
      _
    $region19: #{mine_forward.1} parent=1 // pred_check_branch
      %59 = sbr.rel (0) target = $region21
    $region20: #{mine_forward.1} parent=1 // pred_region
      _
    $region21: #{mine_forward.1} parent=1 // pred_fallthru
      _
    // Predicated region
    $region22: #{mine_forward.1} parent=1 // pred_check
      _
    $region23: #{mine_forward.1} parent=1 // pred_check_branch
      %61 = sbr.rel (0) target = $region25
    $region24: #{mine_forward.1} parent=1 // pred_region
      %62 = dma.done [#allocation3], 128
    $region25: #{mine_forward.1} parent=1 // pred_fallthru
      _
    // Predicated region
    $region26: #{mine_forward.1} parent=1 // pred_check
      _
    $region27: #{mine_forward.1} parent=1 // pred_check_branch
      %64 = sbr.rel (0) target = $region29
    $region28: #{mine_forward.1} parent=1 // pred_region
      %65 = dma.done [#allocation6], 128
    $region29: #{mine_forward.1} parent=1 // pred_fallthru
      _
    // Predicated region
    $region30: #{mine_forward.1} parent=1 // pred_check
      _
    $region31: #{mine_forward.1} parent=1 // pred_check_branch
      %67 = sbr.rel (0) target = $region33
    $region32: #{mine_forward.1} parent=1 // pred_region
      %68 = dma.done [#allocation6], 2048
    $region33: #{mine_forward.1} parent=1 // pred_fallthru
      _
    // Predicated region
    $region34: #{mine_forward.1} parent=1 // pred_check
      _
    $region35: #{mine_forward.1} parent=1 // pred_check_branch
      %70 = sbr.rel (0) target = $region37
    $region36: #{mine_forward.1} parent=1 // pred_region
      %71 = dma.done [#allocation9], 2048
    $region37: #{mine_forward.1} parent=1 // pred_fallthru
      _
    %v72 = vld [vmem:[#allocation2] sm:$0xff]
    %v73 = vld [vmem:[#allocation5] sm:$0xff]
    %v74 = vrot.slane %v73, 7
    %76 = vrot.lane.b32.xlu0 %v73, 64
    %v77 = vpop.permute.xlu0 %76
    %vm79 = vcmask 523264
    %v80 = vsel %vm79, %v72, %v77
    %82 = vrot.lane.b32.xlu0 %v74, 64
    %v83 = vpop.permute.xlu0 %82
    %v85 = vsel %vm79, %v72, %v83
    %v86 = vld [vmem:[%s4] sm:$0x1]
    %v87 = vld [vmem:[%s4 + $0x1] sm:$0x1]
    %v88 = vld [vmem:[%s4 + $0x2] sm:$0x1]
    %v89 = vld [vmem:[%s4 + $0x3] sm:$0x1]
    %v90 = vld [vmem:[#allocation7] sm:$0xff]
    %v91 = vld [vmem:[#allocation7 + $0x8] sm:$0xff]
    %v92 = vld [vmem:[#allocation7 + $0x10] sm:$0xff]
    %v93 = vld [vmem:[#allocation7 + $0x18] sm:$0xff]
    %v94 = vld [vmem:[#allocation7 + $0x20] sm:$0xff]
    %v95 = vld [vmem:[#allocation7 + $0x28] sm:$0xff]
    %v96 = vld [vmem:[#allocation7 + $0x30] sm:$0xff]
    %v97 = vld [vmem:[#allocation7 + $0x38] sm:$0xff]
    %v98 = vld [vmem:[#allocation7 + $0x40] sm:$0xff]
    %v99 = vld [vmem:[#allocation7 + $0x48] sm:$0xff]
    %v100 = vld [vmem:[#allocation7 + $0x50] sm:$0xff]
    %v101 = vld [vmem:[#allocation7 + $0x58] sm:$0xff]
    %v102 = vld [vmem:[#allocation7 + $0x60] sm:$0xff]
    %v103 = vld [vmem:[#allocation7 + $0x68] sm:$0xff]
    %v104 = vld [vmem:[#allocation7 + $0x70] sm:$0xff]
    %v105 = vld [vmem:[#allocation7 + $0x78] sm:$0xff]
    %v106 = vlaneseq
    %v107 = vshrl.u32 %v106, 7
    %v108 = vsub.s32 0, %v107
    %v109 = vrot.slane %v86, %v108
    %110 = vmatprep.subr.mxu0 0.0
    %111 = vmatpush1.msra.mxu0 %v105
    %112 = vmatprep.subr.mxu0 0.0
    %113 = vmatpush1.msra.mxu0 %v104
    %114 = vmatprep.subr.mxu0 0.0
    %115 = vmatpush1.msra.mxu0 %v103
    %116 = vmatprep.subr.mxu0 0.0
    %117 = vmatpush1.msra.mxu0 %v102
    %118 = vmatprep.subr.mxu0 0.0
    %119 = vmatpush1.msra.mxu0 %v101
    %120 = vmatprep.subr.mxu0 0.0
    %121 = vmatpush1.msra.mxu0 %v100
    %122 = vmatprep.subr.mxu0 0.0
    %123 = vmatpush1.msra.mxu0 %v99
    %124 = vmatprep.subr.mxu0 0.0
    %125 = vmatpush1.msra.mxu0 %v98
    %126 = vmatprep.subr.mxu0 0.0
    %127 = vmatpush1.msra.mxu0 %v97
    %128 = vmatprep.subr.mxu0 0.0
    %129 = vmatpush1.msra.mxu0 %v96
    %130 = vmatprep.subr.mxu0 0.0
    %131 = vmatpush1.msra.mxu0 %v95
    %132 = vmatprep.subr.mxu0 0.0
    %133 = vmatpush1.msra.mxu0 %v94
    %134 = vmatprep.subr.mxu0 0.0
    %135 = vmatpush1.msra.mxu0 %v93
    %136 = vmatprep.subr.mxu0 0.0
    %137 = vmatpush1.msra.mxu0 %v92
    %138 = vmatprep.subr.mxu0 0.0
    %139 = vmatpush1.msra.mxu0 %v91
    %140 = vmatprep.subr.mxu0 0.0
    %141 = vmatpush1.msra.mxu0 %v90
    %142 = vmatprep.subr.mxu0 0.0
    %143 = vmatpush2.msra.mxu0 0.0
    %144 = vmatprep.subr.mxu0 0.0
    %145 = vmatpush2.msra.mxu0 0.0
    %146 = vmatprep.subr.mxu0 0.0
    %147 = vmatpush2.msra.mxu0 0.0
    %148 = vmatprep.subr.mxu0 0.0
    %149 = vmatpush2.msra.mxu0 0.0
    %150 = vmatprep.subr.mxu0 0.0
    %151 = vmatpush2.msra.mxu0 0.0
    %152 = vmatprep.subr.mxu0 0.0
    %153 = vmatpush2.msra.mxu0 0.0
    %154 = vmatprep.subr.mxu0 0.0
    %155 = vmatpush2.msra.mxu0 0.0
    %156 = vmatprep.subr.mxu0 0.0
    %157 = vmatpush2.msra.mxu0 0.0
    %158 = vmatprep.subr.mxu0 0.0
    %159 = vmatpush2.msra.mxu0 0.0
    %160 = vmatprep.subr.mxu0 0.0
    %161 = vmatpush2.msra.mxu0 0.0
    %162 = vmatprep.subr.mxu0 0.0
    %163 = vmatpush2.msra.mxu0 0.0
    %164 = vmatprep.subr.mxu0 0.0
    %165 = vmatpush2.msra.mxu0 0.0
    %166 = vmatprep.subr.mxu0 0.0
    %167 = vmatpush2.msra.mxu0 0.0
    %168 = vmatprep.subr.mxu0 0.0
    %169 = vmatpush2.msra.mxu0 0.0
    %170 = vmatprep.subr.mxu0 0.0
    %171 = vmatpush2.msra.mxu0 0.0
    %172 = vmatprep.subr.mxu0 0.0
    %173 = vmatpush2.msra.mxu0 0.0
    %174 = vmatprep.mubr.f32.mxu0 0.0
    %175 = vmatmul.mubr.f32.gmra.mxu0 %v80
    %v176 = vpop.f32.mrf.mxu0
    %v177 = vadd.f32 %v109, %v176
    %v178 = vpop.f32.mrf.mxu0
    %179 = vmatprep.mubr.f32.mxu0 0.0
    %180 = vmatmul.mubr.f32.gmra.mxu0 %v85
    %v181 = vpop.f32.mrf.mxu0
    %v182 = vadd.f32 %v109, %v181
    %v183 = vpop.f32.mrf.mxu0
    %184 = vdwg.mxu0
    %vm185 = vcmp.gt.f32.partialorder %v177, 0.0
    %vm186 = vcmp.gt.f32.partialorder %v182, 0.0
    %v187 = vmul.f32 %v177, 0.2
    %v188 = vmul.f32 %v182, 0.2
    %v189 = vsel %vm185, %v177, %v187
    %v190 = vsel %vm186, %v182, %v188
    %v191 = vld [vmem:[#allocation8] sm:$0xff]
    %v192 = vld [vmem:[#allocation8 + $0x8] sm:$0xff]
    %v193 = vld [vmem:[#allocation8 + $0x10] sm:$0xff]
    %v194 = vld [vmem:[#allocation8 + $0x18] sm:$0xff]
    %v195 = vld [vmem:[#allocation8 + $0x20] sm:$0xff]
    %v196 = vld [vmem:[#allocation8 + $0x28] sm:$0xff]
    %v197 = vld [vmem:[#allocation8 + $0x30] sm:$0xff]
    %v198 = vld [vmem:[#allocation8 + $0x38] sm:$0xff]
    %v199 = vld [vmem:[#allocation8 + $0x40] sm:$0xff]
    %v200 = vld [vmem:[#allocation8 + $0x48] sm:$0xff]
    %v201 = vld [vmem:[#allocation8 + $0x50] sm:$0xff]
    %v202 = vld [vmem:[#allocation8 + $0x58] sm:$0xff]
    %v203 = vld [vmem:[#allocation8 + $0x60] sm:$0xff]
    %v204 = vld [vmem:[#allocation8 + $0x68] sm:$0xff]
    %v205 = vld [vmem:[#allocation8 + $0x70] sm:$0xff]
    %v206 = vld [vmem:[#allocation8 + $0x78] sm:$0xff]
    %v207 = vlaneseq
    %v208 = vshrl.u32 %v207, 7
    %v209 = vsub.s32 0, %v208
    %v210 = vrot.slane %v87, %v209
    %211 = vmatprep.subr.mxu0 0.0
    %212 = vmatpush1.msra.mxu0 %v206
    %213 = vmatprep.subr.mxu0 0.0
    %214 = vmatpush1.msra.mxu0 %v205
    %215 = vmatprep.subr.mxu0 0.0
    %216 = vmatpush1.msra.mxu0 %v204
    %217 = vmatprep.subr.mxu0 0.0
    %218 = vmatpush1.msra.mxu0 %v203
    %219 = vmatprep.subr.mxu0 0.0
    %220 = vmatpush1.msra.mxu0 %v202
    %221 = vmatprep.subr.mxu0 0.0
    %222 = vmatpush1.msra.mxu0 %v201
    %223 = vmatprep.subr.mxu0 0.0
    %224 = vmatpush1.msra.mxu0 %v200
    %225 = vmatprep.subr.mxu0 0.0
    %226 = vmatpush1.msra.mxu0 %v199
    %227 = vmatprep.subr.mxu0 0.0
    %228 = vmatpush1.msra.mxu0 %v198
    %229 = vmatprep.subr.mxu0 0.0
    %230 = vmatpush1.msra.mxu0 %v197
    %231 = vmatprep.subr.mxu0 0.0
    %232 = vmatpush1.msra.mxu0 %v196
    %233 = vmatprep.subr.mxu0 0.0
    %234 = vmatpush1.msra.mxu0 %v195
    %235 = vmatprep.subr.mxu0 0.0
    %236 = vmatpush1.msra.mxu0 %v194
    %237 = vmatprep.subr.mxu0 0.0
    %238 = vmatpush1.msra.mxu0 %v193
    %239 = vmatprep.subr.mxu0 0.0
    %240 = vmatpush1.msra.mxu0 %v192
    %241 = vmatprep.subr.mxu0 0.0
    %242 = vmatpush1.msra.mxu0 %v191
    %243 = vmatprep.subr.mxu0 0.0
    %244 = vmatpush2.msra.mxu0 0.0
    %245 = vmatprep.subr.mxu0 0.0
    %246 = vmatpush2.msra.mxu0 0.0
    %247 = vmatprep.subr.mxu0 0.0
    %248 = vmatpush2.msra.mxu0 0.0
    %249 = vmatprep.subr.mxu0 0.0
    %250 = vmatpush2.msra.mxu0 0.0
    %251 = vmatprep.subr.mxu0 0.0
    %252 = vmatpush2.msra.mxu0 0.0
    %253 = vmatprep.subr.mxu0 0.0
    %254 = vmatpush2.msra.mxu0 0.0
    %255 = vmatprep.subr.mxu0 0.0
    %256 = vmatpush2.msra.mxu0 0.0
    %257 = vmatprep.subr.mxu0 0.0
    %258 = vmatpush2.msra.mxu0 0.0
    %259 = vmatprep.subr.mxu0 0.0
    %260 = vmatpush2.msra.mxu0 0.0
    %261 = vmatprep.subr.mxu0 0.0
    %262 = vmatpush2.msra.mxu0 0.0
    %263 = vmatprep.subr.mxu0 0.0
    %264 = vmatpush2.msra.mxu0 0.0
    %265 = vmatprep.subr.mxu0 0.0
    %266 = vmatpush2.msra.mxu0 0.0
    %267 = vmatprep.subr.mxu0 0.0
    %268 = vmatpush2.msra.mxu0 0.0
    %269 = vmatprep.subr.mxu0 0.0
    %270 = vmatpush2.msra.mxu0 0.0
    %271 = vmatprep.subr.mxu0 0.0
    %272 = vmatpush2.msra.mxu0 0.0
    %273 = vmatprep.subr.mxu0 0.0
    %274 = vmatpush2.msra.mxu0 0.0
    %275 = vmatprep.mubr.f32.mxu0 0.0
    %276 = vmatmul.mubr.f32.gmra.mxu0 %v189
    %v277 = vpop.f32.mrf.mxu0
    %v278 = vadd.f32 %v210, %v277
    %v279 = vpop.f32.mrf.mxu0
    %280 = vmatprep.mubr.f32.mxu0 0.0
    %281 = vmatmul.mubr.f32.gmra.mxu0 %v190
    %v282 = vpop.f32.mrf.mxu0
    %v283 = vadd.f32 %v210, %v282
    %v284 = vpop.f32.mrf.mxu0
    %285 = vdwg.mxu0
    %vm286 = vcmp.gt.f32.partialorder %v278, 0.0
    %vm287 = vcmp.gt.f32.partialorder %v283, 0.0
    %v288 = vmul.f32 %v278, 0.2
    %v289 = vmul.f32 %v283, 0.2
    %v290 = vsel %vm286, %v278, %v288
    %v291 = vsel %vm287, %v283, %v289
    %v292 = vlaneseq
    %v293 = vshrl.u32 %v292, 7
    %v294 = vsub.s32 0, %v293
    %v295 = vrot.slane %v88, %v294
    %v296 = vmul.f32 %v290, %v295
    %v297 = vmul.f32 %v291, %v295
    %298 = vadd.xlane.f32.xlu0 %v296
    %v299 = vpop.xlane.xlu0 %298
    %300 = vadd.xlane.f32.xlu0 %v297
    %v301 = vpop.xlane.xlu0 %300
    %v302 = vlaneseq
    %v303 = vshrl.u32 %v302, 7
    %v304 = vsub.s32 0, %v303
    %v305 = vrot.slane %v89, %v304
    %v306 = vadd.f32 %v299, %v305
    %v307 = vadd.f32 %v301, %v305
    %vm308 = vcmask 7168
    %v309 = vsel %vm308, %v306, 0.0
    %310 = vadd.xlane.f32.xlu0 %v309
    %v311 = vpop.xlane.xlu0 %310
    %v312 = vrot.slane %v311, 4
    %v313 = vadd.f32 %v311, %v312
    %v314 = vrot.slane %v313, 2
    %v315 = vadd.f32 %v313, %v314
    %v316 = vrot.slane %v315, 1
    %v317 = vadd.f32 %v315, %v316
    %s318 = vtos %v317
    %s319 = smul.f32 %s318, 0.125
    %v320 = vsel %vm308, %v307, -inf
    %321 = vmax.xlane.f32.xlu0 %v320
    %v322 = vpop.xlane.xlu0 %321
    %v323 = vrot.slane %v322, 4
    %v324 = vmax.f32 %v322, %v323
    %v325 = vrot.slane %v324, 2
    %v326 = vmax.f32 %v324, %v325
    %v327 = vrot.slane %v326, 1
    %v328 = vmax.f32 %v326, %v327
    %s329 = vtos %v328
    %v330 = vstv %s329
    %v331 = vsub.f32 %v307, %v330
    %v332 = vmul.f32 %v331, 1.442695
    %v333 = vpow.pop %v332
    %v334 = vsel %vm308, %v333, 0.0
    %335 = vadd.xlane.f32.xlu0 %v334
    %v336 = vpop.xlane.xlu0 %335
    %v337 = vrot.slane %v336, 4
    %v338 = vadd.f32 %v336, %v337
    %v339 = vrot.slane %v338, 2
    %v340 = vadd.f32 %v338, %v339
    %v341 = vrot.slane %v340, 1
    %v342 = vadd.f32 %v340, %v341
    %s343 = vtos %v342
    %s344 = smul.f32 %s343, 0.125
    %v345 = vstv %s344
    %v346 = vlog2.pop %v345
    %v347 = vmul.f32 %v346, 0.6931472
    %s348 = vtos %v347
    %s349 = sadd.f32 %s329, %s348
    %v350 = vlaneseq
    %v351 = vshrl.u32 %v350, 7
    %v352 = vadd.s32 %v351, 8
    %vm353 = vcmp.lt.s32.totalorder %v351, 8
    %vm354 = vcmp.lt.s32.totalorder %v352, 8
    %v355 = vsub.f32 0.0, %v306
    %v356 = vsub.f32 0.0, %v307
    %v357 = vsel %vm353, %v355, %v306
    %v358 = vsel %vm354, %v356, %v307
    %v359 = vmax.f32 %v357, 0.0
    %v360 = vmax.f32 %v358, 0.0
    %v361 = vand.u32 2147483647, %v357
    %v362 = vand.u32 2147483647, %v358
    %v363 = vsub.f32 0.0, %v361
    %v364 = vsub.f32 0.0, %v362
    %v365 = vmul.f32 %v363, 1.442695
    %v366 = vpow.pop %v365
    %v367 = vmul.f32 %v364, 1.442695
    %v368 = vpow.pop %v367
    %v369 = vadd.f32 %v366, 1.0
    %v370 = vlog2.pop %v369
    %v371 = vmul.f32 %v370, 0.6931472
    %v372 = vmul.f32 -0.5, %v366
    %v373 = vadd.f32 %v372, 1.0
    %v374 = vmul.f32 %v373, %v366
    %v375 = vand.u32 2147483647, %v366
    %vm376 = vcmp.lt.f32.partialorder %v375, 0.0004427343
    %v377 = vsel %vm376, %v374, %v371
    %v378 = vadd.f32 %v368, 1.0
    %v379 = vlog2.pop %v378
    %v380 = vmul.f32 %v379, 0.6931472
    %v381 = vmul.f32 -0.5, %v368
    %v382 = vadd.f32 %v381, 1.0
    %v383 = vmul.f32 %v382, %v368
    %v384 = vand.u32 2147483647, %v368
    %vm385 = vcmp.lt.f32.partialorder %v384, 0.0004427343
    %v386 = vsel %vm385, %v383, %v380
    %v387 = vadd.f32 %v359, %v377
    %v388 = vadd.f32 %v360, %v386
    %v389 = vsel %vm308, %v387, 0.0
    %v390 = vsel %vm308, %v388, 0.0
    %v391 = vadd.f32 %v389, %v390
    %392 = vadd.xlane.f32.xlu0 %v391
    %v393 = vpop.xlane.xlu0 %392
    %v394 = vrot.slane %v393, 4
    %v395 = vadd.f32 %v393, %v394
    %v396 = vrot.slane %v395, 2
    %v397 = vadd.f32 %v395, %v396
    %v398 = vrot.slane %v397, 1
    %v399 = vadd.f32 %v397, %v398
    %s400 = vtos %v399
    %s401 = smul.f32 %s400, 0.125
    %s402 = ssub.f32 %s319, %s349
    %s403 = scalar_lea.smem [#allocation10], 0
    %404 = sst [smem:[%s403]] %s402
    %s405 = scalar_lea.smem [#allocation10], 1
    %406 = sst [smem:[%s405]] %s401
    // Predicated region
    $region38: #{mine_forward.1} parent=1 // pred_check
      _
    $region39: #{mine_forward.1} parent=1 // pred_check_branch
      %408 = sbr.rel (0) target = $region41
    $region40: #{mine_forward.1} parent=1 // pred_region
      %s410 = ssub.s32 16, 16
      %411 = vsyncadd [#allocation4], %s410
      %s413 = sshll.u32 %s5, 4
      %s414 = int_to_ptr.vmem [resolvable:$true] %s413
      %416 = dma.smem_to_vmem [#allocation10], 16, %s414, [#allocation4]
    $region41: #{mine_forward.1} parent=1 // pred_fallthru
      _
    // Predicated region
    $region42: #{mine_forward.1} parent=1 // pred_check
      _
    $region43: #{mine_forward.1} parent=1 // pred_check_branch
      %418 = sbr.rel (0) target = $region45
    $region44: #{mine_forward.1} parent=1 // pred_region
      %419 = dma.done [#allocation4], 16
    $region45: #{mine_forward.1} parent=1 // pred_fallthru
      _
    %420 = sfence
    %421 = vsyncpa [#allocation3], 1
    %422 = vsyncpa [#allocation6], 1
    %423 = vsyncpa [#allocation9], 1
    %424 = vsyncpa [#allocation4], 1

</llo_original>
